<compile_context>
chip_gen: v6e
topology: v6e:2x2x1
jax: 0.10.0
libtpu: 0.0.40
codegen_flags: <defaults>
</compile_context>

<pallas_src>
import functools

import jax
import jax.numpy as jnp
from jax.experimental import pallas as pl
from jax.experimental.pallas import tpu as pltpu


SUBLANE = 8      # batch (rows) padding granularity
MAX_TB = 1024    # upper bound on batch-tile rows per grid step


def _round_up(x, m):
    return ((x + m - 1) // m) * m


def mlp_kernel(x_ref, w1_ref, b1_ref, w2_ref, b2_ref, w3_ref, b3_ref, o_ref):
    # x arrives f32 (unpadded); cast to bf16 on-chip for the MXU.
    x = x_ref[...].astype(jnp.bfloat16)

    # Layer 1: Linear + ReLU (bf16 MXU operands, f32 accumulate, f32 epilogue)
    h1 = jnp.dot(x, w1_ref[...], preferred_element_type=jnp.float32)
    h1 = jnp.maximum(h1 + b1_ref[...], 0.0)

    # Layer 2: Linear + ReLU
    h2 = jnp.dot(h1.astype(jnp.bfloat16), w2_ref[...],
                 preferred_element_type=jnp.float32)
    h2 = jnp.maximum(h2 + b2_ref[...], 0.0)

    # Layer 3: Linear (no activation)
    out = jnp.dot(h2.astype(jnp.bfloat16), w3_ref[...],
                  preferred_element_type=jnp.float32)
    o_ref[...] = (out + b3_ref[...]).astype(o_ref.dtype)


def prepare_params(w1, b1, w2, b2, w3, b3):
    """One-time parameter prep (hoisted out of the per-call path):
    weights -> bf16 MXU operands, biases -> f32 row vectors."""
    bf16 = jnp.bfloat16
    f32 = jnp.float32
    return (w1.astype(bf16), b1.reshape(1, -1).astype(f32),
            w2.astype(bf16), b2.reshape(1, -1).astype(f32),
            w3.astype(bf16), b3.reshape(1, -1).astype(f32))


@jax.jit
def neural_net_forward(x, params):
    w1, b1, w2, b2, w3, b3 = params
    B, in_size = x.shape
    hid_size = w1.shape[1]
    num_class = w3.shape[1]

    # Pad batch only to the sublane (8); often a no-op.
    B_sub = _round_up(B, SUBLANE)
    # Pick a tile that divides the (sublane-padded) batch exactly -> no
    # partial blocks, at most 8*(n_steps-1) extra padded rows.
    n_steps = pl.cdiv(B_sub, MAX_TB)
    TB = _round_up(pl.cdiv(B_sub, n_steps), SUBLANE)
    B_pad = TB * n_steps
    if B_pad != B:
        x = jnp.pad(x, ((0, B_pad - B), (0, 0)))

    out = pl.pallas_call(
        mlp_kernel,
        out_shape=jax.ShapeDtypeStruct((B_pad, num_class), jnp.float32),
        grid_spec=pl.GridSpec(
            grid=(n_steps,),
            in_specs=[
                pl.BlockSpec((TB, in_size), lambda i: (i, 0)),         # x tile (streamed)
                pl.BlockSpec((in_size, hid_size), lambda i: (0, 0)),   # w1 (resident)
                pl.BlockSpec((1, hid_size), lambda i: (0, 0)),         # b1 (resident)
                pl.BlockSpec((hid_size, hid_size), lambda i: (0, 0)),  # w2 (resident)
                pl.BlockSpec((1, hid_size), lambda i: (0, 0)),         # b2 (resident)
                pl.BlockSpec((hid_size, num_class), lambda i: (0, 0)), # w3 (resident)
                pl.BlockSpec((1, num_class), lambda i: (0, 0)),        # b3 (resident)
            ],
            out_specs=pl.BlockSpec((TB, num_class), lambda i: (i, 0)),
        ),
        compiler_params=pltpu.CompilerParams(
            dimension_semantics=("parallel",),
        ),
    )(x, w1, b1, w2, b2, w3, b3)

    # Trim batch padding only if any was added (no class-dim trim needed).
    return out if B_pad == B else out[:B]


def reference_forward(x, w1, b1, w2, b2, w3, b3):
    h1 = jnp.maximum(x @ w1 + b1, 0.0)
    h2 = jnp.maximum(h1 @ w2 + b2, 0.0)
    return h2 @ w3 + b3


if __name__ == "__main__":
    # Small shapes consistent with NeuralNet(in_size, hid_size, num_class)
    B, in_size, hid_size, num_class = 8, 32, 32, 8

    key = jax.random.PRNGKey(0)
    kx, k1, k2, k3, kb1, kb2, kb3, kx2 = jax.random.split(key, 8)

    x = jax.random.normal(kx, (B, in_size), dtype=jnp.float32)

    # Deterministic parameter init (weights stored as (in, out) = PyTorch W.T)
    scale1 = 1.0 / jnp.sqrt(in_size)
    scale2 = 1.0 / jnp.sqrt(hid_size)
    w1 = jax.random.uniform(k1, (in_size, hid_size), jnp.float32, -scale1, scale1)
    b1 = jax.random.uniform(kb1, (hid_size,), jnp.float32, -scale1, scale1)
    w2 = jax.random.uniform(k2, (hid_size, hid_size), jnp.float32, -scale2, scale2)
    b2 = jax.random.uniform(kb2, (hid_size,), jnp.float32, -scale2, scale2)
    w3 = jax.random.uniform(k3, (hid_size, num_class), jnp.float32, -scale2, scale2)
    b3 = jax.random.uniform(kb3, (num_class,), jnp.float32, -scale2, scale2)

    # One-time parameter prep (bf16 weight cast hoisted out of the hot path).
    params = prepare_params(w1, b1, w2, b2, w3, b3)

    # --- Small-batch run (single grid step) ---
    out = neural_net_forward(x, params)
    out = jax.block_until_ready(out)
    ref = reference_forward(x, w1, b1, w2, b2, w3, b3)
    assert out.shape == (B, num_class)
    # bf16 MXU operands with f32 accumulation -> loosened tolerance vs f32 ref.
    assert jnp.allclose(out, ref, atol=5e-2, rtol=5e-2), "mismatch vs reference (small batch)"

    # --- Larger, non-multiple-of-8 batch (exercises batch padding + multi-step grid) ---
    B_big = 2052
    x_big = jax.random.normal(kx2, (B_big, in_size), dtype=jnp.float32)
    out_big = neural_net_forward(x_big, params)
    out_big = jax.block_until_ready(out_big)
    ref_big = reference_forward(x_big, w1, b1, w2, b2, w3, b3)
    assert out_big.shape == (B_big, num_class)
    assert jnp.allclose(out_big, ref_big, atol=5e-2, rtol=5e-2), "mismatch vs reference (big batch)"

    print("KERNEL_OK")
</pallas_src>

<mosaic_0001>
module attributes {stable_mosaic.version = 11 : i64} {
  func.func @mlp_kernel(%arg0: i32, %arg1: memref<8x32xf32, #tpu.memory_space<vmem>>, %arg2: memref<32x32xbf16, #tpu.memory_space<vmem>>, %arg3: memref<1x32xf32, #tpu.memory_space<vmem>>, %arg4: memref<32x32xbf16, #tpu.memory_space<vmem>>, %arg5: memref<1x32xf32, #tpu.memory_space<vmem>>, %arg6: memref<32x8xbf16, #tpu.memory_space<vmem>>, %arg7: memref<1x8xf32, #tpu.memory_space<vmem>>, %arg8: memref<8x8xf32, #tpu.memory_space<vmem>>) attributes {dimension_semantics = [#tpu.dimension_semantics<parallel>], iteration_bounds = array<i64: 1>, scalar_prefetch = 0 : i64, scratch_operands = 0 : i64, tpu.core_type = #tpu.core_type<tc>, window_params = [{transform_indices = @transform_0, window_bounds = array<i64: 8, 32>}, {pipeline_mode = #tpu.pipeline_mode<synchronous>, transform_indices = @transform_1, window_bounds = array<i64: 32, 32>}, {pipeline_mode = #tpu.pipeline_mode<synchronous>, transform_indices = @transform_2, window_bounds = array<i64: 1, 32>}, {pipeline_mode = #tpu.pipeline_mode<synchronous>, transform_indices = @transform_3, window_bounds = array<i64: 32, 32>}, {pipeline_mode = #tpu.pipeline_mode<synchronous>, transform_indices = @transform_4, window_bounds = array<i64: 1, 32>}, {pipeline_mode = #tpu.pipeline_mode<synchronous>, transform_indices = @transform_5, window_bounds = array<i64: 32, 8>}, {pipeline_mode = #tpu.pipeline_mode<synchronous>, transform_indices = @transform_6, window_bounds = array<i64: 1, 8>}, {transform_indices = @transform_7, window_bounds = array<i64: 8, 8>}]} {
    %c0 = arith.constant 0 : index
    %c0_0 = arith.constant 0 : index
    %0 = vector.load %arg1[%c0, %c0_0] : memref<8x32xf32, #tpu.memory_space<vmem>>, vector<8x32xf32>
    %1 = arith.truncf %0 : vector<8x32xf32> to vector<8x32xbf16>
    %c0_1 = arith.constant 0 : index
    %c0_2 = arith.constant 0 : index
    %2 = vector.load %arg2[%c0_1, %c0_2] : memref<32x32xbf16, #tpu.memory_space<vmem>>, vector<32x32xbf16>
    %cst = arith.constant dense<0.000000e+00> : vector<8x32xf32>
    %3 = tpu.matmul %1, %2, %cst {dimension_numbers = #tpu.dot_dimension_numbers<[1], [0], [0], [1], [0, 0, 1, 1], [], []>} : vector<8x32xbf16>, vector<32x32xbf16>, vector<8x32xf32> -> vector<8x32xf32>
    %c0_3 = arith.constant 0 : index
    %c0_4 = arith.constant 0 : index
    %4 = vector.load %arg3[%c0_3, %c0_4] : memref<1x32xf32, #tpu.memory_space<vmem>>, vector<1x32xf32>
    %5 = vector.broadcast %4 : vector<1x32xf32> to vector<8x32xf32>
    %6 = arith.addf %3, %5 : vector<8x32xf32>
    %cst_5 = arith.constant 0.000000e+00 : f32
    %7 = vector.broadcast %cst_5 : f32 to vector<8x32xf32>
    %8 = arith.maximumf %6, %7 : vector<8x32xf32>
    %9 = arith.truncf %8 : vector<8x32xf32> to vector<8x32xbf16>
    %c0_6 = arith.constant 0 : index
    %c0_7 = arith.constant 0 : index
    %10 = vector.load %arg4[%c0_6, %c0_7] : memref<32x32xbf16, #tpu.memory_space<vmem>>, vector<32x32xbf16>
    %cst_8 = arith.constant dense<0.000000e+00> : vector<8x32xf32>
    %11 = tpu.matmul %9, %10, %cst_8 {dimension_numbers = #tpu.dot_dimension_numbers<[1], [0], [0], [1], [0, 0, 1, 1], [], []>} : vector<8x32xbf16>, vector<32x32xbf16>, vector<8x32xf32> -> vector<8x32xf32>
    %c0_9 = arith.constant 0 : index
    %c0_10 = arith.constant 0 : index
    %12 = vector.load %arg5[%c0_9, %c0_10] : memref<1x32xf32, #tpu.memory_space<vmem>>, vector<1x32xf32>
    %13 = vector.broadcast %12 : vector<1x32xf32> to vector<8x32xf32>
    %14 = arith.addf %11, %13 : vector<8x32xf32>
    %cst_11 = arith.constant 0.000000e+00 : f32
    %15 = vector.broadcast %cst_11 : f32 to vector<8x32xf32>
    %16 = arith.maximumf %14, %15 : vector<8x32xf32>
    %17 = arith.truncf %16 : vector<8x32xf32> to vector<8x32xbf16>
    %c0_12 = arith.constant 0 : index
    %c0_13 = arith.constant 0 : index
    %18 = vector.load %arg6[%c0_12, %c0_13] : memref<32x8xbf16, #tpu.memory_space<vmem>>, vector<32x8xbf16>
    %cst_14 = arith.constant dense<0.000000e+00> : vector<8x8xf32>
    %19 = tpu.matmul %17, %18, %cst_14 {dimension_numbers = #tpu.dot_dimension_numbers<[1], [0], [0], [1], [0, 0, 1, 1], [], []>} : vector<8x32xbf16>, vector<32x8xbf16>, vector<8x8xf32> -> vector<8x8xf32>
    %c0_15 = arith.constant 0 : index
    %c0_16 = arith.constant 0 : index
    %20 = vector.load %arg7[%c0_15, %c0_16] : memref<1x8xf32, #tpu.memory_space<vmem>>, vector<1x8xf32>
    %21 = vector.broadcast %20 : vector<1x8xf32> to vector<8x8xf32>
    %22 = arith.addf %19, %21 : vector<8x8xf32>
    %c0_17 = arith.constant 0 : index
    %c0_18 = arith.constant 0 : index
    %23 = vector.load %arg8[%c0_17, %c0_18] : memref<8x8xf32, #tpu.memory_space<vmem>>, vector<8x8xf32>
    tpu.vector_store %arg8[%c0_17, %c0_18], %22 {strides = array<i32>} : memref<8x8xf32, #tpu.memory_space<vmem>>, vector<8x8xf32>,
    return
  }
  func.func @transform_0(%arg0: i32) -> (i32, i32) {
    %c0_i32 = arith.constant 0 : i32
    %c0_i32_0 = arith.constant 0 : i32
    return %arg0, %c0_i32 : i32, i32
  }
  func.func @transform_1(%arg0: i32) -> (i32, i32) {
    %c0_i32 = arith.constant 0 : i32
    %c0_i32_0 = arith.constant 0 : i32
    %c0_i32_1 = arith.constant 0 : i32
    return %c0_i32, %c0_i32_0 : i32, i32
  }
  func.func @transform_2(%arg0: i32) -> (i32, i32) {
    %c0_i32 = arith.constant 0 : i32
    %c0_i32_0 = arith.constant 0 : i32
    %c0_i32_1 = arith.constant 0 : i32
    return %c0_i32, %c0_i32_0 : i32, i32
  }
  func.func @transform_3(%arg0: i32) -> (i32, i32) {
    %c0_i32 = arith.constant 0 : i32
    %c0_i32_0 = arith.constant 0 : i32
    %c0_i32_1 = arith.constant 0 : i32
    return %c0_i32, %c0_i32_0 : i32, i32
  }
  func.func @transform_4(%arg0: i32) -> (i32, i32) {
    %c0_i32 = arith.constant 0 : i32
    %c0_i32_0 = arith.constant 0 : i32
    %c0_i32_1 = arith.constant 0 : i32
    return %c0_i32, %c0_i32_0 : i32, i32
  }
  func.func @transform_5(%arg0: i32) -> (i32, i32) {
    %c0_i32 = arith.constant 0 : i32
    %c0_i32_0 = arith.constant 0 : i32
    %c0_i32_1 = arith.constant 0 : i32
    return %c0_i32, %c0_i32_0 : i32, i32
  }
  func.func @transform_6(%arg0: i32) -> (i32, i32) {
    %c0_i32 = arith.constant 0 : i32
    %c0_i32_0 = arith.constant 0 : i32
    %c0_i32_1 = arith.constant 0 : i32
    return %c0_i32, %c0_i32_0 : i32, i32
  }
  func.func @transform_7(%arg0: i32) -> (i32, i32) {
    %c0_i32 = arith.constant 0 : i32
    %c0_i32_0 = arith.constant 0 : i32
    return %arg0, %c0_i32 : i32, i32
  }
}

</mosaic_0001>

<llo_original>
// kernel: neural_net_forward.1
$region0: #{neural_net_forward.1}
  #allocation0 [shape = 'u32[]', space=smem, size = 0x4, offset = 0x4, fixed_abs, tag = 'smem constant byte address 0x4 - core index']
  #allocation1 [shape = 'u32[144,128]{1,0:T(1,128)}', space=vmem, size = 0x12000, scoped, tag = 'internal scratch']
  %s0 = inlined_call_operand.hbm [shape: f32[8,32], index: 0, kind: input, shape index: {}]
  %s1 = inlined_call_operand.vmem [shape: bf16[32,32], index: 1, kind: input, shape index: {}]
  %s2 = inlined_call_operand.vmem [shape: f32[1,32], index: 2, kind: input, shape index: {}]
  %s3 = inlined_call_operand.hbm [shape: bf16[32,32], index: 3, kind: input, shape index: {}]
  %s4 = inlined_call_operand.vmem [shape: f32[1,32], index: 4, kind: input, shape index: {}]
  %s5 = inlined_call_operand.vmem [shape: bf16[32,8], index: 5, kind: input, shape index: {}]
  %s6 = inlined_call_operand.vmem [shape: f32[1,8], index: 6, kind: input, shape index: {}]
  %s7 = inlined_call_operand.hbm [shape: f32[8,8], index: 7, kind: output, shape index: {}]
  %s8 = sld [smem:[#allocation0]]
  $region46: #{neural_net_forward.1} parent=0
    _
  %s10 = ssub.s32 1, %s8
  %s11 = scalar_select 0, %s10, %s8
  $region1: #{neural_net_forward.1} parent=0
    #allocation2 [shape = 'u8[4096]{0}', space=vmem, size = 0x1000, scoped, tag = 'input window, operand 0, single buffered']
    #allocation3 [shape = 's32[1]{0}', space=sflag, size = 0x4, scoped, tag = 'scoped memory for neural_net_forward.1']
    #allocation4 [shape = 's32[1]{0}', space=sflag, size = 0x4, scoped, tag = 'scoped memory for neural_net_forward.1']
    #allocation5 [shape = 'u8[8192]{0}', space=vmem, size = 0x2000, scoped, tag = 'input window, operand 3, single buffered']
    #allocation6 [shape = 's32[1]{0}', space=sflag, size = 0x4, scoped, tag = 'scoped memory for neural_net_forward.1']
    #allocation7 [shape = 'u8[4096]{0}', space=vmem, size = 0x1000, scoped, tag = 'output window, operand 0, single buffered']
    %12 = vsyncpa [#allocation3], 0
    %13 = vsyncpa [#allocation6], 0
    %14 = vsyncpa [#allocation4], 0
    // Predicated region
    $region2: #{neural_net_forward.1} parent=1 // pred_check
      _
    $region3: #{neural_net_forward.1} parent=1 // pred_check_branch
      %16 = sbr.rel (0) target = $region5
    $region4: #{neural_net_forward.1} parent=1 // pred_region
      %s18 = ssub.s32 128, 128
      %19 = vsyncadd [#allocation3], %s18
      %s21 = sshll.u32 [#allocation2], 4
      %s22 = int_to_ptr.vmem [resolvable:$true] %s21
      %24 = dma.hbm_to_vmem [thread:$0]  %s0, 128, %s22, [#allocation3]
    $region5: #{neural_net_forward.1} parent=1 // pred_fallthru
      _
    // Predicated region
    $region6: #{neural_net_forward.1} parent=1 // pred_check
      _
    $region7: #{neural_net_forward.1} parent=1 // pred_check_branch
      %26 = sbr.rel (0) target = $region9
    $region8: #{neural_net_forward.1} parent=1 // pred_region
      _
    $region9: #{neural_net_forward.1} parent=1 // pred_fallthru
      _
    // Predicated region
    $region10: #{neural_net_forward.1} parent=1 // pred_check
      _
    $region11: #{neural_net_forward.1} parent=1 // pred_check_branch
      %28 = sbr.rel (0) target = $region13
    $region12: #{neural_net_forward.1} parent=1 // pred_region
      _
    $region13: #{neural_net_forward.1} parent=1 // pred_fallthru
      _
    // Predicated region
    $region14: #{neural_net_forward.1} parent=1 // pred_check
      _
    $region15: #{neural_net_forward.1} parent=1 // pred_check_branch
      %30 = sbr.rel (0) target = $region17
    $region16: #{neural_net_forward.1} parent=1 // pred_region
      %s32 = ssub.s32 256, 256
      %33 = vsyncadd [#allocation6], %s32
      %s34 = sshll.u32 [#allocation5], 4
      %s35 = int_to_ptr.vmem [resolvable:$true] %s34
      %40 = dma.hbm_to_vmem [thread:$0]  %s3, 256, %s35, [#allocation6], 64, 64, 4
    $region17: #{neural_net_forward.1} parent=1 // pred_fallthru
      _
    // Predicated region
    $region18: #{neural_net_forward.1} parent=1 // pred_check
      _
    $region19: #{neural_net_forward.1} parent=1 // pred_check_branch
      %42 = sbr.rel (0) target = $region21
    $region20: #{neural_net_forward.1} parent=1 // pred_region
      _
    $region21: #{neural_net_forward.1} parent=1 // pred_fallthru
      _
    // Predicated region
    $region22: #{neural_net_forward.1} parent=1 // pred_check
      _
    $region23: #{neural_net_forward.1} parent=1 // pred_check_branch
      %44 = sbr.rel (0) target = $region25
    $region24: #{neural_net_forward.1} parent=1 // pred_region
      _
    $region25: #{neural_net_forward.1} parent=1 // pred_fallthru
      _
    // Predicated region
    $region26: #{neural_net_forward.1} parent=1 // pred_check
      _
    $region27: #{neural_net_forward.1} parent=1 // pred_check_branch
      %46 = sbr.rel (0) target = $region29
    $region28: #{neural_net_forward.1} parent=1 // pred_region
      _
    $region29: #{neural_net_forward.1} parent=1 // pred_fallthru
      _
    // Predicated region
    $region30: #{neural_net_forward.1} parent=1 // pred_check
      _
    $region31: #{neural_net_forward.1} parent=1 // pred_check_branch
      %48 = sbr.rel (0) target = $region33
    $region32: #{neural_net_forward.1} parent=1 // pred_region
      %49 = dma.done [#allocation3], 128
    $region33: #{neural_net_forward.1} parent=1 // pred_fallthru
      _
    // Predicated region
    $region34: #{neural_net_forward.1} parent=1 // pred_check
      _
    $region35: #{neural_net_forward.1} parent=1 // pred_check_branch
      %51 = sbr.rel (0) target = $region37
    $region36: #{neural_net_forward.1} parent=1 // pred_region
      %52 = dma.done [#allocation6], 256
    $region37: #{neural_net_forward.1} parent=1 // pred_fallthru
      _
    %v54 = vld [vmem:[#allocation2] sm:$0xff]
    %v55 = vpack.c.bf16 %v54, %v54
    %v56 = vld [vmem:[%s1] sm:$0xf]
    %v57 = vld [vmem:[%s1 + $0x4] sm:$0xf]
    %v58 = vld [vmem:[%s1 + $0x8] sm:$0xf]
    %v59 = vld [vmem:[%s1 + $0xc] sm:$0xf]
    %v60 = vld [vmem:[%s2] sm:$0x1]
    %v62 = vlaneseq
    %v63 = vshrl.u32 %v62, 7
    %v64 = vsub.s32 0, %v63
    %v65 = vrot.slane %v60, %v64
    %v71 = vunpack.c.l.b16 %v56
    %v72 = vunpack.c.l.b16 %v57
    %v73 = vunpack.c.l.b16 %v58
    %v74 = vunpack.c.l.b16 %v59
    %v75 = vpack.c.b16 %v72, %v71
    %v76 = vpack.c.b16 %v74, %v73
    %vm79 = vcmask 261120
    %v81 = vsel %vm79, %v55, 0
    %83 = vmatprep.subr.bf16.mxu0 0
    %84 = vmatpush1.bf16.msra.mxu0 0
    %85 = vmatprep.subr.bf16.mxu0 0
    %86 = vmatpush1.bf16.msra.mxu0 0
    %87 = vmatprep.subr.bf16.mxu0 0
    %88 = vmatpush1.bf16.msra.mxu0 0
    %89 = vmatprep.subr.bf16.mxu0 0
    %90 = vmatpush1.bf16.msra.mxu0 0
    %91 = vmatprep.subr.bf16.mxu0 0
    %92 = vmatpush1.bf16.msra.mxu0 0
    %93 = vmatprep.subr.bf16.mxu0 0
    %94 = vmatpush1.bf16.msra.mxu0 0
    %95 = vmatprep.subr.bf16.mxu0 0
    %96 = vmatpush1.bf16.msra.mxu0 %v76
    %97 = vmatprep.subr.bf16.mxu0 0
    %98 = vmatpush1.bf16.msra.mxu0 %v75
    %99 = vmatprep.subr.bf16.mxu0 0
    %100 = vmatpush2.bf16.msra.mxu0 0
    %101 = vmatprep.subr.bf16.mxu0 0
    %102 = vmatpush2.bf16.msra.mxu0 0
    %103 = vmatprep.subr.bf16.mxu0 0
    %104 = vmatpush2.bf16.msra.mxu0 0
    %105 = vmatprep.subr.bf16.mxu0 0
    %106 = vmatpush2.bf16.msra.mxu0 0
    %107 = vmatprep.subr.bf16.mxu0 0
    %108 = vmatpush2.bf16.msra.mxu0 0
    %109 = vmatprep.subr.bf16.mxu0 0
    %110 = vmatpush2.bf16.msra.mxu0 0
    %111 = vmatprep.subr.bf16.mxu0 0
    %112 = vmatpush2.bf16.msra.mxu0 0
    %113 = vmatprep.subr.bf16.mxu0 0
    %114 = vmatpush2.bf16.msra.mxu0 0
    %115 = vmatprep.mubr.bf16.mxu0 0
    %116 = vmatmul.mubr.bf16.gmra.mxu0 %v81
    %v117 = vpop.f32.mrf.mxu0
    %v118 = vadd.f32 %v65, %v117
    %v119 = vpop.f32.mrf.mxu0
    %v120 = vpop.f32.mrf.mxu0
    %v121 = vpop.f32.mrf.mxu0
    %122 = vdwg.mxu0
    %v123 = vmax.f32 %v118, 0.0
    %v124 = vpack.c.bf16 %v123, %v123
    %v125 = vld [vmem:[#allocation5] sm:$0xf]
    %v126 = vld [vmem:[#allocation5 + $0x4] sm:$0xf]
    %v127 = vld [vmem:[#allocation5 + $0x8] sm:$0xf]
    %v128 = vld [vmem:[#allocation5 + $0xc] sm:$0xf]
    %v129 = vld [vmem:[%s4] sm:$0x1]
    %v131 = vlaneseq
    %v132 = vshrl.u32 %v131, 7
    %v133 = vsub.s32 0, %v132
    %v134 = vrot.slane %v129, %v133
    %v140 = vunpack.c.l.b16 %v125
    %v141 = vunpack.c.l.b16 %v126
    %v142 = vunpack.c.l.b16 %v127
    %v143 = vunpack.c.l.b16 %v128
    %v144 = vpack.c.b16 %v141, %v140
    %v145 = vpack.c.b16 %v143, %v142
    %v149 = vsel %vm79, %v124, 0
    %151 = vmatprep.subr.bf16.mxu0 0
    %152 = vmatpush1.bf16.msra.mxu0 0
    %153 = vmatprep.subr.bf16.mxu0 0
    %154 = vmatpush1.bf16.msra.mxu0 0
    %155 = vmatprep.subr.bf16.mxu0 0
    %156 = vmatpush1.bf16.msra.mxu0 0
    %157 = vmatprep.subr.bf16.mxu0 0
    %158 = vmatpush1.bf16.msra.mxu0 0
    %159 = vmatprep.subr.bf16.mxu0 0
    %160 = vmatpush1.bf16.msra.mxu0 0
    %161 = vmatprep.subr.bf16.mxu0 0
    %162 = vmatpush1.bf16.msra.mxu0 0
    %163 = vmatprep.subr.bf16.mxu0 0
    %164 = vmatpush1.bf16.msra.mxu0 %v145
    %165 = vmatprep.subr.bf16.mxu0 0
    %166 = vmatpush1.bf16.msra.mxu0 %v144
    %167 = vmatprep.subr.bf16.mxu0 0
    %168 = vmatpush2.bf16.msra.mxu0 0
    %169 = vmatprep.subr.bf16.mxu0 0
    %170 = vmatpush2.bf16.msra.mxu0 0
    %171 = vmatprep.subr.bf16.mxu0 0
    %172 = vmatpush2.bf16.msra.mxu0 0
    %173 = vmatprep.subr.bf16.mxu0 0
    %174 = vmatpush2.bf16.msra.mxu0 0
    %175 = vmatprep.subr.bf16.mxu0 0
    %176 = vmatpush2.bf16.msra.mxu0 0
    %177 = vmatprep.subr.bf16.mxu0 0
    %178 = vmatpush2.bf16.msra.mxu0 0
    %179 = vmatprep.subr.bf16.mxu0 0
    %180 = vmatpush2.bf16.msra.mxu0 0
    %181 = vmatprep.subr.bf16.mxu0 0
    %182 = vmatpush2.bf16.msra.mxu0 0
    %183 = vmatprep.mubr.bf16.mxu0 0
    %184 = vmatmul.mubr.bf16.gmra.mxu0 %v149
    %v185 = vpop.f32.mrf.mxu0
    %v186 = vadd.f32 %v134, %v185
    %v187 = vpop.f32.mrf.mxu0
    %v188 = vpop.f32.mrf.mxu0
    %v189 = vpop.f32.mrf.mxu0
    %190 = vdwg.mxu0
    %v191 = vmax.f32 %v186, 0.0
    %v192 = vpack.c.bf16 %v191, %v191
    %v193 = vld [vmem:[%s5] sm:$0xf]
    %v194 = vld [vmem:[%s5 + $0x4] sm:$0xf]
    %v195 = vld [vmem:[%s5 + $0x8] sm:$0xf]
    %v196 = vld [vmem:[%s5 + $0xc] sm:$0xf]
    %v197 = vld [vmem:[%s6] sm:$0x1]
    %v199 = vlaneseq
    %v200 = vshrl.u32 %v199, 7
    %v201 = vsub.s32 0, %v200
    %v202 = vrot.slane %v197, %v201
    %v208 = vunpack.c.l.b16 %v193
    %v209 = vunpack.c.l.b16 %v194
    %v210 = vunpack.c.l.b16 %v195
    %v211 = vunpack.c.l.b16 %v196
    %v212 = vpack.c.b16 %v209, %v208
    %v213 = vpack.c.b16 %v211, %v210
    %v217 = vsel %vm79, %v192, 0
    %219 = vmatprep.subr.bf16.mxu0 0
    %220 = vmatpush1.bf16.msra.mxu0 0
    %221 = vmatprep.subr.bf16.mxu0 0
    %222 = vmatpush1.bf16.msra.mxu0 0
    %223 = vmatprep.subr.bf16.mxu0 0
    %224 = vmatpush1.bf16.msra.mxu0 0
    %225 = vmatprep.subr.bf16.mxu0 0
    %226 = vmatpush1.bf16.msra.mxu0 0
    %227 = vmatprep.subr.bf16.mxu0 0
    %228 = vmatpush1.bf16.msra.mxu0 0
    %229 = vmatprep.subr.bf16.mxu0 0
    %230 = vmatpush1.bf16.msra.mxu0 0
    %231 = vmatprep.subr.bf16.mxu0 0
    %232 = vmatpush1.bf16.msra.mxu0 %v213
    %233 = vmatprep.subr.bf16.mxu0 0
    %234 = vmatpush1.bf16.msra.mxu0 %v212
    %235 = vmatprep.subr.bf16.mxu0 0
    %236 = vmatpush2.bf16.msra.mxu0 0
    %237 = vmatprep.subr.bf16.mxu0 0
    %238 = vmatpush2.bf16.msra.mxu0 0
    %239 = vmatprep.subr.bf16.mxu0 0
    %240 = vmatpush2.bf16.msra.mxu0 0
    %241 = vmatprep.subr.bf16.mxu0 0
    %242 = vmatpush2.bf16.msra.mxu0 0
    %243 = vmatprep.subr.bf16.mxu0 0
    %244 = vmatpush2.bf16.msra.mxu0 0
    %245 = vmatprep.subr.bf16.mxu0 0
    %246 = vmatpush2.bf16.msra.mxu0 0
    %247 = vmatprep.subr.bf16.mxu0 0
    %248 = vmatpush2.bf16.msra.mxu0 0
    %249 = vmatprep.subr.bf16.mxu0 0
    %250 = vmatpush2.bf16.msra.mxu0 0
    %251 = vmatprep.mubr.bf16.mxu0 0
    %252 = vmatmul.mubr.bf16.gmra.mxu0 %v217
    %v253 = vpop.f32.mrf.mxu0
    %v254 = vadd.f32 %v202, %v253
    %v255 = vpop.f32.mrf.mxu0
    %v256 = vpop.f32.mrf.mxu0
    %v257 = vpop.f32.mrf.mxu0
    %258 = vdwg.mxu0
    %vm259 = vcmask 64512
    %260 = vst.msk [vmem:[#allocation7] sm:$0xff] %vm259, %v254
    // Predicated region
    $region38: #{neural_net_forward.1} parent=1 // pred_check
      _
    $region39: #{neural_net_forward.1} parent=1 // pred_check_branch
      %262 = sbr.rel (0) target = $region41
    $region40: #{neural_net_forward.1} parent=1 // pred_region
      %s264 = ssub.s32 128, 128
      %265 = vsyncadd [#allocation4], %s264
      %s267 = sshll.u32 [#allocation7], 4
      %s268 = int_to_ptr.vmem [resolvable:$true] %s267
      %270 = dma.vmem_to_hbm [thread:$0]  %s268, 128, %s7, [#allocation4]
    $region41: #{neural_net_forward.1} parent=1 // pred_fallthru
      _
    // Predicated region
    $region42: #{neural_net_forward.1} parent=1 // pred_check
      _
    $region43: #{neural_net_forward.1} parent=1 // pred_check_branch
      %272 = sbr.rel (0) target = $region45
    $region44: #{neural_net_forward.1} parent=1 // pred_region
      %273 = dma.done [#allocation4], 128
    $region45: #{neural_net_forward.1} parent=1 // pred_fallthru
      _
    %274 = vsyncpa [#allocation3], 1
    %275 = vsyncpa [#allocation6], 1
    %276 = vsyncpa [#allocation4], 1

</llo_original>
